<compile_context>
chip_gen: v5e
topology: v5e:2x2
jax: 0.10.0
libtpu: 0.0.40
codegen_flags: <defaults>
</compile_context>

<pallas_src>
import numpy as np
import jax
import jax.numpy as jnp
from jax.experimental import pallas as pl
from jax.experimental.pallas import tpu as pltpu

LEAKY_SLOPE = 0.01          # nn.LeakyReLU default
BN_EPS = 1e-5               # nn.BatchNorm3d default
FILTER_SIZES = (6, 12, 24, 48)
LANE_TILE_CAP = 16384       # safe on v5e/v6e/v7x scoped-VMEM defaults


# ------------------------------ kernels ----------------------------------- #

def _make_fused_kernel(d4, tn, hw, ragged):
    """Four fused (conv+pool) stages + per-tile BN partial sums."""

    def kernel(x_ref, w1_ref, b1_ref, w2_ref, b2_ref, w3_ref, b3_ref,
               w4_ref, b4_ref, y_ref, ps_ref, pq_ref):

        def leaky(v):
            return jnp.maximum(v, LEAKY_SLOPE * v)

        def stage(a, w_ref, b_ref):
            return jnp.dot(w_ref[...], a.astype(w_ref.dtype),
                           preferred_element_type=jnp.float32) + b_ref[...]

        a = x_ref[...]                          # (D, tn), input dtype
        a = leaky(stage(a, w1_ref, b1_ref))     # conv1 + pair-pool + leaky
        a = leaky(stage(a, w2_ref, b2_ref))     # conv2 + pair-pool + leaky
        a = leaky(stage(a, w3_ref, b3_ref))     # conv3 + pair-pool + leaky
        a = stage(a, w4_ref, b4_ref)            # conv4 + global channel avg
        y = leaky(a[:d4, :])                    # leaky AFTER the global pool
        y_ref[...] = y

        # BatchNorm partial statistics for this tile (mask out ragged lanes).
        if ragged:
            n = pl.program_id(1)
            valid = hw - n * tn
            lane = jax.lax.broadcasted_iota(jnp.int32, y.shape, 1)
            ym = jnp.where(lane < valid, y, 0.0)
        else:
            ym = y
        ps_ref[...] = jnp.sum(jnp.sum(ym, axis=1, keepdims=True),
                              axis=0, keepdims=True)
        pq_ref[...] = jnp.sum(jnp.sum(ym * ym, axis=1, keepdims=True),
                              axis=0, keepdims=True)

    return kernel


def bn_normalize_kernel(stats_ref, y_ref, o_ref):
    """BatchNorm3d(1) normalization; stats_ref = [mean, inv_std] in SMEM."""
    o_ref[...] = (y_ref[...] - stats_ref[0]) * stats_ref[1]


# ------------------------- host-side parameter prep ----------------------- #

def _round_up(v, m):
    return ((v + m - 1) // m) * m


def init_params(key, filter_sizes=FILTER_SIZES):
    """Raw per-stage conv weights (C_out, C_in, 3) and biases (C_out,), numpy.

    Mirrors the module's xavier_uniform_ / zeros_ init.  (The PyTorch module
    accidentally re-initializes conv3 twice and leaves conv4 at its default
    init; parameter init does not affect forward semantics.)
    """
    c_in = [1, filter_sizes[0] // 2, filter_sizes[1] // 2, filter_sizes[2] // 2]
    c_out = list(filter_sizes)
    keys = jax.random.split(key, 4)
    ws, bs = [], []
    for k, ci, co in zip(keys, c_in, c_out):
        fan_in, fan_out = ci * 3, co * 3
        bound = float(np.sqrt(6.0 / (fan_in + fan_out)))
        w = jax.random.uniform(k, (co, ci, 3), jnp.float32, -bound, bound)
        ws.append(np.asarray(w))
        bs.append(np.zeros((co,), np.float32))
    return ws, bs


def build_fused_params(raw_params, D, filter_sizes=FILTER_SIZES):
    """Fold stride-2 depth conv + channel-pair AvgPool (stages 1-3) + global
    channel average (stage 4) into one banded matrix per stage.  Output rows
    are padded to multiples of 8; the stage-1 K dim stays exactly D (no input
    padding needed).  Exact: every folded op is linear."""
    ws, bs = raw_params
    c_in = [1, filter_sizes[0] // 2, filter_sizes[1] // 2, filter_sizes[2] // 2]
    c_out = list(filter_sizes)

    mixers = []
    for co in c_out[:3]:
        P = np.zeros((co // 2, co), np.float32)
        for i in range(co // 2):
            P[i, 2 * i] = 0.5
            P[i, 2 * i + 1] = 0.5
        mixers.append(P)
    mixers.append(np.full((1, c_out[3]), 1.0 / c_out[3], np.float32))

    depths = [D]
    for _ in range(4):
        depths.append((depths[-1] - 1) // 2 + 1)        # conv k=3,s=2,p=1

    Wf, bf = [], []
    r_in = depths[0] * c_in[0]                          # = D (unpadded)
    for s in range(4):
        D_in, D_out, ci = depths[s], depths[s + 1], c_in[s]
        M = mixers[s]                                   # (ce, co)
        ce = M.shape[0]
        we = np.einsum('ec,cik->eik', M, ws[s])         # pooled weights
        be = M @ bs[s]                                  # pooled bias
        r_out = D_out * ce
        r_out_pad = _round_up(r_out, 8)
        Wb = np.zeros((r_out_pad, r_in), np.float32)
        bb = np.zeros((r_out_pad, 1), np.float32)
        for do in range(D_out):
            bb[do * ce:(do + 1) * ce, 0] = be
            for k in range(3):
                di = 2 * do + k - 1                     # padding = 1
                if 0 <= di < D_in:
                    Wb[do * ce:(do + 1) * ce, di * ci:(di + 1) * ci] = we[:, :, k]
        Wf.append(Wb)
        bf.append(bb)
        r_in = r_out_pad                                # next stage K (padded)
    return Wf, bf, depths


# ------------------------------- wrapper ----------------------------------- #

def prebackbone_forward(x, fused_params, param_dtype=jnp.bfloat16,
                        lane_tile_cap=LANE_TILE_CAP):
    Wf, bf, depths = fused_params
    B, D, H, W = x.shape
    assert D == depths[0], "fused params were built for a different input depth"
    HW = H * W
    D4 = depths[-1]

    tn = min(_round_up(HW, 128), lane_tile_cap)         # lane tile (mult of 128)
    grid_hw = pl.cdiv(HW, tn)
    ragged = (HW % tn) != 0

    # Free reshape — no transpose, no pad, no cast of the input in XLA.
    x3 = x.reshape(B, D, HW)

    flat, flat_specs = [], []
    for w, b in zip(Wf, bf):
        flat.append(jnp.asarray(w, dtype=param_dtype))  # weights (bf16 default)
        flat.append(jnp.asarray(b, dtype=jnp.float32))  # bias stays f32
    flat_specs = [pl.BlockSpec(p.shape, lambda b_, n_: (0, 0)) for p in flat]

    fused_kernel = _make_fused_kernel(D4, tn, HW, ragged)

    y, ps, pq = pl.pallas_call(
        fused_kernel,
        out_shape=(jax.ShapeDtypeStruct((B, D4, HW), jnp.float32),
                   jax.ShapeDtypeStruct((B, grid_hw, 1, 1), jnp.float32),
                   jax.ShapeDtypeStruct((B, grid_hw, 1, 1), jnp.float32)),
        grid=(B, grid_hw),
        in_specs=[pl.BlockSpec((None, D, tn), lambda b_, n_: (b_, 0, n_))]
                 + flat_specs,
        out_specs=(pl.BlockSpec((None, D4, tn), lambda b_, n_: (b_, 0, n_)),
                   pl.BlockSpec((None, None, 1, 1), lambda b_, n_: (b_, n_, 0, 0)),
                   pl.BlockSpec((None, None, 1, 1), lambda b_, n_: (b_, n_, 0, 0))),
        compiler_params=pltpu.CompilerParams(
            dimension_semantics=("parallel", "parallel")),
    )(x3, *flat)

    # Combine the per-tile partial sums (a handful of scalars) in XLA.
    cnt = jnp.float32(B * D4 * HW)
    mean = jnp.sum(ps) / cnt
    var = jnp.maximum(jnp.sum(pq) / cnt - mean * mean, 0.0)
    stats = jnp.stack([mean, jax.lax.rsqrt(var + BN_EPS)]).astype(jnp.float32)

    # Normalize pass, writing the PyTorch layout (B, D4, HW) directly.
    out = pl.pallas_call(
        bn_normalize_kernel,
        out_shape=jax.ShapeDtypeStruct((B, D4, HW), jnp.float32),
        grid=(B, grid_hw),
        in_specs=[pl.BlockSpec(memory_space=pltpu.MemorySpace.SMEM),
                  pl.BlockSpec((None, D4, tn), lambda b_, n_: (b_, 0, n_))],
        out_specs=pl.BlockSpec((None, D4, tn), lambda b_, n_: (b_, 0, n_)),
        compiler_params=pltpu.CompilerParams(
            dimension_semantics=("parallel", "parallel")),
    )(stats, y)

    return out.reshape(B, D4, H, W)                     # free reshape


# ----------------------- pure-JAX reference (for checking) ----------------- #

def _reference_forward(x, raw_params):
    """Direct transcription of the PyTorch forward (f32, HIGHEST precision)."""
    ws, bs = raw_params
    hp = jax.lax.Precision.HIGHEST
    y = x[:, None].astype(jnp.float32)                  # (B, 1, D, H, W)
    for s in range(4):
        w = jnp.asarray(ws[s])                          # (co, ci, 3)
        b = jnp.asarray(bs[s])                          # (co,)
        Bb, ci, Din, Hh, Ww = y.shape
        Dout = (Din - 1) // 2 + 1
        yp = jnp.pad(y, ((0, 0), (0, 0), (1, 1), (0, 0), (0, 0)))
        outs = []
        for do in range(Dout):
            acc = jnp.zeros((Bb, w.shape[0], Hh, Ww), jnp.float32)
            for k in range(3):
                acc = acc + jnp.einsum('oc,bchw->bohw', w[:, :, k],
                                       yp[:, :, 2 * do + k], precision=hp)
            outs.append(acc + b[None, :, None, None])
        y = jnp.stack(outs, axis=2)                     # (B, co, Dout, H, W)
        if s < 3:
            co = y.shape[1]
            y = 0.5 * (y[:, 0:co:2] + y[:, 1:co:2])     # AvgPool over channels
        else:
            y = jnp.mean(y, axis=1, keepdims=True)      # AdaptiveAvgPool -> 1
        y = jnp.where(y > 0, y, LEAKY_SLOPE * y)        # LeakyReLU
    mean = jnp.mean(y)
    var = jnp.mean(jnp.square(y - mean))
    y = (y - mean) * jax.lax.rsqrt(var + BN_EPS)        # BatchNorm3d(1), train
    return y[:, 0]


# --------------------------------- main ------------------------------------ #

if __name__ == "__main__":
    key = jax.random.PRNGKey(0)
    k_x, k_p = jax.random.split(key)

    B, D, H, W = 2, 16, 16, 16
    x = jax.random.normal(k_x, (B, D, H, W), dtype=jnp.float32)

    raw_params = init_params(k_p)
    fused = build_fused_params(raw_params, D)
    D4 = fused[2][-1]

    fwd_bf16 = jax.jit(lambda xx: prebackbone_forward(xx, fused, jnp.bfloat16))
    fwd_f32 = jax.jit(lambda xx: prebackbone_forward(xx, fused, jnp.float32))

    out = jax.block_until_ready(fwd_bf16(x))            # fast (default) path
    assert out.shape == (B, D4, H, W), out.shape
    assert bool(jnp.all(jnp.isfinite(out)))

    ref = _reference_forward(x, raw_params)

    out_f32 = jax.block_until_ready(fwd_f32(x))         # strict-parity path
    err_f32 = float(jnp.max(jnp.abs(out_f32 - ref)))
    assert err_f32 < 1e-2, f"f32 max abs err vs reference = {err_f32}"

    err_bf16 = float(jnp.max(jnp.abs(out - ref)))       # bf16 fast-path sanity
    assert err_bf16 < 2.5e-1, f"bf16 max abs err vs reference = {err_bf16}"

    print("KERNEL_OK")
</pallas_src>

<mosaic_0001>
module attributes {stable_mosaic.version = 11 : i64} {
  func.func @kernel(%arg0: i32, %arg1: i32, %arg2: memref<1x16x256xf32, #tpu.memory_space<vmem>>, %arg3: memref<24x16xbf16, #tpu.memory_space<vmem>>, %arg4: memref<24x1xf32, #tpu.memory_space<vmem>>, %arg5: memref<24x24xbf16, #tpu.memory_space<vmem>>, %arg6: memref<24x1xf32, #tpu.memory_space<vmem>>, %arg7: memref<24x24xbf16, #tpu.memory_space<vmem>>, %arg8: memref<24x1xf32, #tpu.memory_space<vmem>>, %arg9: memref<8x24xbf16, #tpu.memory_space<vmem>>, %arg10: memref<8x1xf32, #tpu.memory_space<vmem>>, %arg11: memref<1x1x256xf32, #tpu.memory_space<vmem>>, %arg12: memref<1x1x1x1xf32, #tpu.memory_space<vmem>>, %arg13: memref<1x1x1x1xf32, #tpu.memory_space<vmem>>) attributes {dimension_semantics = [#tpu.dimension_semantics<parallel>, #tpu.dimension_semantics<parallel>], iteration_bounds = array<i64: 2, 1>, scalar_prefetch = 0 : i64, scratch_operands = 0 : i64, tpu.core_type = #tpu.core_type<tc>, window_params = [{transform_indices = @transform_0, window_bounds = array<i64: 1, 16, 256>}, {pipeline_mode = #tpu.pipeline_mode<synchronous>, transform_indices = @transform_1, window_bounds = array<i64: 24, 16>}, {pipeline_mode = #tpu.pipeline_mode<synchronous>, transform_indices = @transform_2, window_bounds = array<i64: 24, 1>}, {pipeline_mode = #tpu.pipeline_mode<synchronous>, transform_indices = @transform_3, window_bounds = array<i64: 24, 24>}, {pipeline_mode = #tpu.pipeline_mode<synchronous>, transform_indices = @transform_4, window_bounds = array<i64: 24, 1>}, {pipeline_mode = #tpu.pipeline_mode<synchronous>, transform_indices = @transform_5, window_bounds = array<i64: 24, 24>}, {pipeline_mode = #tpu.pipeline_mode<synchronous>, transform_indices = @transform_6, window_bounds = array<i64: 24, 1>}, {pipeline_mode = #tpu.pipeline_mode<synchronous>, transform_indices = @transform_7, window_bounds = array<i64: 8, 24>}, {pipeline_mode = #tpu.pipeline_mode<synchronous>, transform_indices = @transform_8, window_bounds = array<i64: 8, 1>}, {transform_indices = @transform_9, window_bounds = array<i64: 1, 1, 256>}, {transform_indices = @transform_10, window_bounds = array<i64: 1, 1, 1, 1>}, {transform_indices = @transform_11, window_bounds = array<i64: 1, 1, 1, 1>}]} {
    %c0 = arith.constant 0 : index
    %c0_0 = arith.constant 0 : index
    %c0_1 = arith.constant 0 : index
    %0 = vector.load %arg2[%c0, %c0_0, %c0_1] : memref<1x16x256xf32, #tpu.memory_space<vmem>>, vector<1x16x256xf32>
    %1 = vector.shape_cast %0 : vector<1x16x256xf32> to vector<16x256xf32>
    %c0_2 = arith.constant 0 : index
    %c0_3 = arith.constant 0 : index
    %2 = vector.load %arg3[%c0_2, %c0_3] : memref<24x16xbf16, #tpu.memory_space<vmem>>, vector<24x16xbf16>
    %3 = arith.truncf %1 : vector<16x256xf32> to vector<16x256xbf16>
    %cst = arith.constant dense<0.000000e+00> : vector<24x256xf32>
    %4 = tpu.matmul %2, %3, %cst {dimension_numbers = #tpu.dot_dimension_numbers<[1], [0], [0], [1], [0, 0, 1, 1], [], []>} : vector<24x16xbf16>, vector<16x256xbf16>, vector<24x256xf32> -> vector<24x256xf32>
    %c0_4 = arith.constant 0 : index
    %c0_5 = arith.constant 0 : index
    %5 = vector.load %arg4[%c0_4, %c0_5] : memref<24x1xf32, #tpu.memory_space<vmem>>, vector<24x1xf32>
    %6 = vector.broadcast %5 : vector<24x1xf32> to vector<24x256xf32>
    %7 = arith.addf %4, %6 : vector<24x256xf32>
    %cst_6 = arith.constant 0.00999999977 : f32
    %8 = vector.broadcast %cst_6 : f32 to vector<24x256xf32>
    %9 = arith.mulf %8, %7 : vector<24x256xf32>
    %10 = arith.maximumf %7, %9 : vector<24x256xf32>
    %c0_7 = arith.constant 0 : index
    %c0_8 = arith.constant 0 : index
    %11 = vector.load %arg5[%c0_7, %c0_8] : memref<24x24xbf16, #tpu.memory_space<vmem>>, vector<24x24xbf16>
    %12 = arith.truncf %10 : vector<24x256xf32> to vector<24x256xbf16>
    %cst_9 = arith.constant dense<0.000000e+00> : vector<24x256xf32>
    %13 = tpu.matmul %11, %12, %cst_9 {dimension_numbers = #tpu.dot_dimension_numbers<[1], [0], [0], [1], [0, 0, 1, 1], [], []>} : vector<24x24xbf16>, vector<24x256xbf16>, vector<24x256xf32> -> vector<24x256xf32>
    %c0_10 = arith.constant 0 : index
    %c0_11 = arith.constant 0 : index
    %14 = vector.load %arg6[%c0_10, %c0_11] : memref<24x1xf32, #tpu.memory_space<vmem>>, vector<24x1xf32>
    %15 = vector.broadcast %14 : vector<24x1xf32> to vector<24x256xf32>
    %16 = arith.addf %13, %15 : vector<24x256xf32>
    %cst_12 = arith.constant 0.00999999977 : f32
    %17 = vector.broadcast %cst_12 : f32 to vector<24x256xf32>
    %18 = arith.mulf %17, %16 : vector<24x256xf32>
    %19 = arith.maximumf %16, %18 : vector<24x256xf32>
    %c0_13 = arith.constant 0 : index
    %c0_14 = arith.constant 0 : index
    %20 = vector.load %arg7[%c0_13, %c0_14] : memref<24x24xbf16, #tpu.memory_space<vmem>>, vector<24x24xbf16>
    %21 = arith.truncf %19 : vector<24x256xf32> to vector<24x256xbf16>
    %cst_15 = arith.constant dense<0.000000e+00> : vector<24x256xf32>
    %22 = tpu.matmul %20, %21, %cst_15 {dimension_numbers = #tpu.dot_dimension_numbers<[1], [0], [0], [1], [0, 0, 1, 1], [], []>} : vector<24x24xbf16>, vector<24x256xbf16>, vector<24x256xf32> -> vector<24x256xf32>
    %c0_16 = arith.constant 0 : index
    %c0_17 = arith.constant 0 : index
    %23 = vector.load %arg8[%c0_16, %c0_17] : memref<24x1xf32, #tpu.memory_space<vmem>>, vector<24x1xf32>
    %24 = vector.broadcast %23 : vector<24x1xf32> to vector<24x256xf32>
    %25 = arith.addf %22, %24 : vector<24x256xf32>
    %cst_18 = arith.constant 0.00999999977 : f32
    %26 = vector.broadcast %cst_18 : f32 to vector<24x256xf32>
    %27 = arith.mulf %26, %25 : vector<24x256xf32>
    %28 = arith.maximumf %25, %27 : vector<24x256xf32>
    %c0_19 = arith.constant 0 : index
    %c0_20 = arith.constant 0 : index
    %29 = vector.load %arg9[%c0_19, %c0_20] : memref<8x24xbf16, #tpu.memory_space<vmem>>, vector<8x24xbf16>
    %30 = arith.truncf %28 : vector<24x256xf32> to vector<24x256xbf16>
    %cst_21 = arith.constant dense<0.000000e+00> : vector<8x256xf32>
    %31 = tpu.matmul %29, %30, %cst_21 {dimension_numbers = #tpu.dot_dimension_numbers<[1], [0], [0], [1], [0, 0, 1, 1], [], []>} : vector<8x24xbf16>, vector<24x256xbf16>, vector<8x256xf32> -> vector<8x256xf32>
    %c0_22 = arith.constant 0 : index
    %c0_23 = arith.constant 0 : index
    %32 = vector.load %arg10[%c0_22, %c0_23] : memref<8x1xf32, #tpu.memory_space<vmem>>, vector<8x1xf32>
    %33 = vector.broadcast %32 : vector<8x1xf32> to vector<8x256xf32>
    %34 = arith.addf %31, %33 : vector<8x256xf32>
    %35 = vector.extract_strided_slice %34 {offsets = [0, 0], sizes = [1, 256], strides = [1, 1]} : vector<8x256xf32> to vector<1x256xf32>
    %cst_24 = arith.constant 0.00999999977 : f32
    %36 = vector.broadcast %cst_24 : f32 to vector<1x256xf32>
    %37 = arith.mulf %36, %35 : vector<1x256xf32>
    %38 = arith.maximumf %35, %37 : vector<1x256xf32>
    %c0_25 = arith.constant 0 : index
    %c0_26 = arith.constant 0 : index
    %c0_27 = arith.constant 0 : index
    %39 = vector.load %arg11[%c0_25, %c0_26, %c0_27] : memref<1x1x256xf32, #tpu.memory_space<vmem>>, vector<1x1x256xf32>
    %40 = vector.shape_cast %39 : vector<1x1x256xf32> to vector<1x256xf32>
    %41 = vector.shape_cast %38 : vector<1x256xf32> to vector<1x1x256xf32>
    tpu.vector_store %arg11[%c0_25, %c0_26, %c0_27], %41 {strides = array<i32>} : memref<1x1x256xf32, #tpu.memory_space<vmem>>, vector<1x1x256xf32>,
    %cst_28 = arith.constant dense<0.000000e+00> : vector<1xf32>
    %42 = vector.multi_reduction <add>, %38, %cst_28 [1] : vector<1x256xf32> to vector<1xf32>
    %43 = vector.shape_cast %42 : vector<1xf32> to vector<1x1xf32>
    %cst_29 = arith.constant dense<0.000000e+00> : vector<1xf32>
    %44 = vector.multi_reduction <add>, %43, %cst_29 [0] : vector<1x1xf32> to vector<1xf32>
    %45 = vector.shape_cast %44 : vector<1xf32> to vector<1x1xf32>
    %c0_30 = arith.constant 0 : index
    %c0_31 = arith.constant 0 : index
    %c0_32 = arith.constant 0 : index
    %c0_33 = arith.constant 0 : index
    %46 = vector.load %arg12[%c0_30, %c0_31, %c0_32, %c0_33] : memref<1x1x1x1xf32, #tpu.memory_space<vmem>>, vector<1x1x1x1xf32>
    %47 = vector.shape_cast %46 : vector<1x1x1x1xf32> to vector<1x1xf32>
    %48 = vector.shape_cast %45 : vector<1x1xf32> to vector<1x1x1x1xf32>
    tpu.vector_store %arg12[%c0_30, %c0_31, %c0_32, %c0_33], %48 {strides = array<i32>} : memref<1x1x1x1xf32, #tpu.memory_space<vmem>>, vector<1x1x1x1xf32>,
    %49 = arith.mulf %38, %38 : vector<1x256xf32>
    %cst_34 = arith.constant dense<0.000000e+00> : vector<1xf32>
    %50 = vector.multi_reduction <add>, %49, %cst_34 [1] : vector<1x256xf32> to vector<1xf32>
    %51 = vector.shape_cast %50 : vector<1xf32> to vector<1x1xf32>
    %cst_35 = arith.constant dense<0.000000e+00> : vector<1xf32>
    %52 = vector.multi_reduction <add>, %51, %cst_35 [0] : vector<1x1xf32> to vector<1xf32>
    %53 = vector.shape_cast %52 : vector<1xf32> to vector<1x1xf32>
    %c0_36 = arith.constant 0 : index
    %c0_37 = arith.constant 0 : index
    %c0_38 = arith.constant 0 : index
    %c0_39 = arith.constant 0 : index
    %54 = vector.load %arg13[%c0_36, %c0_37, %c0_38, %c0_39] : memref<1x1x1x1xf32, #tpu.memory_space<vmem>>, vector<1x1x1x1xf32>
    %55 = vector.shape_cast %54 : vector<1x1x1x1xf32> to vector<1x1xf32>
    %56 = vector.shape_cast %53 : vector<1x1xf32> to vector<1x1x1x1xf32>
    tpu.vector_store %arg13[%c0_36, %c0_37, %c0_38, %c0_39], %56 {strides = array<i32>} : memref<1x1x1x1xf32, #tpu.memory_space<vmem>>, vector<1x1x1x1xf32>,
    return
  }
  func.func @transform_0(%arg0: i32, %arg1: i32) -> (i32, i32, i32) {
    %c0_i32 = arith.constant 0 : i32
    %c0_i32_0 = arith.constant 0 : i32
    return %arg0, %c0_i32, %arg1 : i32, i32, i32
  }
  func.func @transform_1(%arg0: i32, %arg1: i32) -> (i32, i32) {
    %c0_i32 = arith.constant 0 : i32
    %c0_i32_0 = arith.constant 0 : i32
    %c0_i32_1 = arith.constant 0 : i32
    return %c0_i32, %c0_i32_0 : i32, i32
  }
  func.func @transform_2(%arg0: i32, %arg1: i32) -> (i32, i32) {
    %c0_i32 = arith.constant 0 : i32
    %c0_i32_0 = arith.constant 0 : i32
    %c0_i32_1 = arith.constant 0 : i32
    return %c0_i32, %c0_i32_0 : i32, i32
  }
  func.func @transform_3(%arg0: i32, %arg1: i32) -> (i32, i32) {
    %c0_i32 = arith.constant 0 : i32
    %c0_i32_0 = arith.constant 0 : i32
    %c0_i32_1 = arith.constant 0 : i32
    return %c0_i32, %c0_i32_0 : i32, i32
  }
  func.func @transform_4(%arg0: i32, %arg1: i32) -> (i32, i32) {
    %c0_i32 = arith.constant 0 : i32
    %c0_i32_0 = arith.constant 0 : i32
    %c0_i32_1 = arith.constant 0 : i32
    return %c0_i32, %c0_i32_0 : i32, i32
  }
  func.func @transform_5(%arg0: i32, %arg1: i32) -> (i32, i32) {
    %c0_i32 = arith.constant 0 : i32
    %c0_i32_0 = arith.constant 0 : i32
    %c0_i32_1 = arith.constant 0 : i32
    return %c0_i32, %c0_i32_0 : i32, i32
  }
  func.func @transform_6(%arg0: i32, %arg1: i32) -> (i32, i32) {
    %c0_i32 = arith.constant 0 : i32
    %c0_i32_0 = arith.constant 0 : i32
    %c0_i32_1 = arith.constant 0 : i32
    return %c0_i32, %c0_i32_0 : i32, i32
  }
  func.func @transform_7(%arg0: i32, %arg1: i32) -> (i32, i32) {
    %c0_i32 = arith.constant 0 : i32
    %c0_i32_0 = arith.constant 0 : i32
    %c0_i32_1 = arith.constant 0 : i32
    return %c0_i32, %c0_i32_0 : i32, i32
  }
  func.func @transform_8(%arg0: i32, %arg1: i32) -> (i32, i32) {
    %c0_i32 = arith.constant 0 : i32
    %c0_i32_0 = arith.constant 0 : i32
    %c0_i32_1 = arith.constant 0 : i32
    return %c0_i32, %c0_i32_0 : i32, i32
  }
  func.func @transform_9(%arg0: i32, %arg1: i32) -> (i32, i32, i32) {
    %c0_i32 = arith.constant 0 : i32
    %c0_i32_0 = arith.constant 0 : i32
    return %arg0, %c0_i32, %arg1 : i32, i32, i32
  }
  func.func @transform_10(%arg0: i32, %arg1: i32) -> (i32, i32, i32, i32) {
    %c0_i32 = arith.constant 0 : i32
    %c0_i32_0 = arith.constant 0 : i32
    %c0_i32_1 = arith.constant 0 : i32
    return %arg0, %arg1, %c0_i32, %c0_i32_0 : i32, i32, i32, i32
  }
  func.func @transform_11(%arg0: i32, %arg1: i32) -> (i32, i32, i32, i32) {
    %c0_i32 = arith.constant 0 : i32
    %c0_i32_0 = arith.constant 0 : i32
    %c0_i32_1 = arith.constant 0 : i32
    return %arg0, %arg1, %c0_i32, %c0_i32_0 : i32, i32, i32, i32
  }
}

module attributes {stable_mosaic.version = 11 : i64} {
  func.func @bn_normalize_kernel(%arg0: i32, %arg1: i32, %arg2: memref<2xf32, #tpu.memory_space<smem>>, %arg3: memref<1x1x256xf32, #tpu.memory_space<vmem>>, %arg4: memref<1x1x256xf32, #tpu.memory_space<vmem>>) attributes {dimension_semantics = [#tpu.dimension_semantics<parallel>, #tpu.dimension_semantics<parallel>], iteration_bounds = array<i64: 2, 1>, scalar_prefetch = 0 : i64, scratch_operands = 0 : i64, tpu.core_type = #tpu.core_type<tc>, window_params = [{transform_indices = @transform_0, window_bounds = array<i64: 2>}, {transform_indices = @transform_1, window_bounds = array<i64: 1, 1, 256>}, {transform_indices = @transform_2, window_bounds = array<i64: 1, 1, 256>}]} {
    %c0 = arith.constant 0 : index
    %c0_0 = arith.constant 0 : index
    %c0_1 = arith.constant 0 : index
    %0 = vector.load %arg3[%c0, %c0_0, %c0_1] : memref<1x1x256xf32, #tpu.memory_space<vmem>>, vector<1x1x256xf32>
    %1 = vector.shape_cast %0 : vector<1x1x256xf32> to vector<1x256xf32>
    %c0_2 = arith.constant 0 : index
    %2 = memref.load %arg2[%c0_2] : memref<2xf32, #tpu.memory_space<smem>>
    %3 = vector.broadcast %2 : f32 to vector<1x256xf32>
    %4 = arith.subf %1, %3 : vector<1x256xf32>
    %c1 = arith.constant 1 : index
    %5 = memref.load %arg2[%c1] : memref<2xf32, #tpu.memory_space<smem>>
    %6 = vector.broadcast %5 : f32 to vector<1x256xf32>
    %7 = arith.mulf %4, %6 : vector<1x256xf32>
    %c0_3 = arith.constant 0 : index
    %c0_4 = arith.constant 0 : index
    %c0_5 = arith.constant 0 : index
    %8 = vector.load %arg4[%c0_3, %c0_4, %c0_5] : memref<1x1x256xf32, #tpu.memory_space<vmem>>, vector<1x1x256xf32>
    %9 = vector.shape_cast %8 : vector<1x1x256xf32> to vector<1x256xf32>
    %10 = vector.shape_cast %7 : vector<1x256xf32> to vector<1x1x256xf32>
    tpu.vector_store %arg4[%c0_3, %c0_4, %c0_5], %10 {strides = array<i32>} : memref<1x1x256xf32, #tpu.memory_space<vmem>>, vector<1x1x256xf32>,
    return
  }
  func.func @transform_0(%arg0: i32, %arg1: i32) -> i32 {
    %c0_i32 = arith.constant 0 : i32
    %c0_i32_0 = arith.constant 0 : i32
    return %c0_i32 : i32
  }
  func.func @transform_1(%arg0: i32, %arg1: i32) -> (i32, i32, i32) {
    %c0_i32 = arith.constant 0 : i32
    %c0_i32_0 = arith.constant 0 : i32
    return %arg0, %c0_i32, %arg1 : i32, i32, i32
  }
  func.func @transform_2(%arg0: i32, %arg1: i32) -> (i32, i32, i32) {
    %c0_i32 = arith.constant 0 : i32
    %c0_i32_0 = arith.constant 0 : i32
    return %arg0, %c0_i32, %arg1 : i32, i32, i32
  }
}

</mosaic_0001>

<llo_original>
// kernel: _lambda_.3
$region0: #{_lambda_.3}
  #allocation0 [shape = 'u32[]', space=smem, size = 0x4, offset = 0x4, fixed_abs, tag = 'smem constant byte address 0x4 - core index']
  #allocation1 [shape = 'u32[72,128]{1,0:T(1,128)}', space=vmem, size = 0x9000, scoped, tag = 'internal scratch']
  %s0 = inlined_call_operand.vmem [shape: f32[2], index: 0, kind: input, shape index: {}]
  %s1 = inlined_call_operand.vmem [shape: f32[2,1,256], index: 1, kind: input, shape index: {}]
  %s2 = inlined_call_operand.vmem [shape: f32[2,1,256], index: 2, kind: output, shape index: {}]
  %s3 = sld [smem:[#allocation0]]
  $region45: #{_lambda_.3} parent=0
    _
  %s5 = ssub.s32 1, %s3
  %s6 = scalar_select 0, %s5, %s3
  $region1: #{_lambda_.3} parent=0
    #allocation2 [shape = 'u8[512]{0}', space=smem, size = 0x200, scoped, tag = 'input window, operand 0, single buffered']
    #allocation3 [shape = 's32[2]{0}', space=sflag, size = 0x8, scoped, tag = 'scoped memory for _lambda_.3']
    %7 = vsyncpa [#allocation3], 0
    loop: start=0, step=1, limit=4
    $region2: #{_lambda_.3} parent=1 // loop_pre_header
      _
    $region3: #{_lambda_.3} parent=1 // loop_header
      %s9 = sphi 0, %s13
      %p10 = scmp.ge.s32.totalorder %s9, 4
      %s16 = sphi 0, %s28
      %s17 = sphi 0, %s24
      %s18 = sphi 0, %s16
      %s19 = sphi 0, %s17
      %s20 = sphi 0, %s18
      %s21 = sphi 0, %s19
      %s29 = sphi 0, %s29
      %s31 = sphi 0, %s29
      %s32 = sphi 0, %s31
      %s46 = sphi 0, %s32
      %s54 = sphi 0, %s56
      %s57 = sphi 0, %s54
      %s58 = sphi 0, %s57
      %s74 = sphi 0, %s58
      %s82 = sphi 0, %s84
      %s85 = sphi 0, %s82
      %s86 = sphi 0, %s85
      %s102 = sphi 0, %s86
    $region4: #{_lambda_.3} parent=1 // loop_header_branch
      %12 = sbr.rel (%p10) target = $region8
    $region5: #{_lambda_.3} parent=1 // loop_body
      %s14 = ssub.s32 %s9, 1
      %s15 = ssub.s32 %s9, 2
      %s22 = sadd.s32 1, %s17
      %p23 = scmp.ge.s32.totalorder %s22, 1
      %s24 = scalar_select %p23, 0, %s22
      %s25 = sadd.s32 1, %s16
      %s26 = scalar_select %p23, %s25, %s16
      %p27 = scmp.ge.s32.totalorder %s26, 2
      %s28 = scalar_select %p27, 0, %s26
      %s30 = sadd.s32 %s29, 1
      %p33 = scmp.eq.s32.totalorder %s9, 1
      %p34 = scmp.ne.s32.totalorder %s29, %s31
      %p35 = scmp.eq.s32.totalorder %s9, 0
      %p36 = por %p34, %p35
      %p37 = scmp.ne.s32.totalorder %s29, %s31
      %p38 = scmp.eq.s32.totalorder %s14, 1
      %p39 = por %p37, %p38
      %p40 = scmp.ne.s32.totalorder %s31, %s32
      %p41 = scmp.eq.s32.totalorder %s14, 0
      %p42 = por %p40, %p41
      %p43 = scmp.ne.s32.totalorder %s31, %s32
      %p44 = scmp.eq.s32.totalorder %s15, 1
      %p45 = por %p43, %p44
      %p47 = scmp.ne.s32.totalorder %s32, %s46
      %p48 = scmp.eq.s32.totalorder %s15, 0
      %p49 = por %p47, %p48
      %s50 = ssub.s32 %s16, %s28
      %s51 = ssub.s32 %s17, %s24
      %s52 = sor.u32 %s50, %s51
      %p53 = scmp.eq.s32.totalorder %s52, 0
      %s55 = sadd.s32 %s54, 1
      %s56 = scalar_select %p53, %s54, %s55
      %p59 = pneg %p53
      %p60 = scmp.eq.s32.totalorder %s9, 1
      %p61 = por %p59, %p60
      %p62 = scmp.ne.s32.totalorder %s54, %s57
      %p63 = scmp.eq.s32.totalorder %s9, 0
      %p64 = por %p62, %p63
      %p65 = scmp.ne.s32.totalorder %s54, %s57
      %p66 = scmp.eq.s32.totalorder %s14, 1
      %p67 = por %p65, %p66
      %p68 = scmp.ne.s32.totalorder %s57, %s58
      %p69 = scmp.eq.s32.totalorder %s14, 0
      %p70 = por %p68, %p69
      %p71 = scmp.ne.s32.totalorder %s57, %s58
      %p72 = scmp.eq.s32.totalorder %s15, 1
      %p73 = por %p71, %p72
      %p75 = scmp.ne.s32.totalorder %s58, %s74
      %p76 = scmp.eq.s32.totalorder %s15, 0
      %p77 = por %p75, %p76
      %s78 = ssub.s32 %s16, %s28
      %s79 = ssub.s32 %s17, %s24
      %s80 = sor.u32 %s78, %s79
      %p81 = scmp.eq.s32.totalorder %s80, 0
      %s83 = sadd.s32 %s82, 1
      %s84 = scalar_select %p81, %s82, %s83
      %p87 = pneg %p81
      %p88 = scmp.eq.s32.totalorder %s9, 1
      %p89 = por %p87, %p88
      %p90 = scmp.ne.s32.totalorder %s82, %s85
      %p91 = scmp.eq.s32.totalorder %s9, 0
      %p92 = por %p90, %p91
      %p93 = scmp.ne.s32.totalorder %s82, %s85
      %p94 = scmp.eq.s32.totalorder %s14, 1
      %p95 = por %p93, %p94
      %p96 = scmp.ne.s32.totalorder %s85, %s86
      %p97 = scmp.eq.s32.totalorder %s14, 0
      %p98 = por %p96, %p97
      %p99 = scmp.ne.s32.totalorder %s85, %s86
      %p100 = scmp.eq.s32.totalorder %s15, 1
      %p101 = por %p99, %p100
      %p103 = scmp.ne.s32.totalorder %s86, %s102
      %p104 = scmp.eq.s32.totalorder %s15, 0
      %p105 = por %p103, %p104
      %p106 = scmp.le.s32.totalorder 1, %s9
      %p107 = scmp.lt.s32.totalorder %s9, 3
      %p108 = pnand %p106, %p107
      %p109 = pneg %p108
      // Predicated region
      $region9: #{_lambda_.3} parent=5 // pred_check
        _
      $region10: #{_lambda_.3} parent=5 // pred_check_branch
        %111 = sbr.rel (%p108) target = $region12
      $region11: #{_lambda_.3} parent=5 // pred_region
        %s112 = ssub.s32 %s9, 1
        // Predicated region
        $region13: #{_lambda_.3} parent=11 // pred_check
          %p113 = pneg %p42
        $region14: #{_lambda_.3} parent=11 // pred_check_branch
          %115 = sbr.rel (%p113) target = $region16
        $region15: #{_lambda_.3} parent=11 // pred_region
          %117 = vsyncadd [#allocation3], 0
          %s119 = sshll.u32 %s0, 4
          %s120 = int_to_ptr.vmem [resolvable:$true] %s119
          %122 = dma.vmem_to_smem %s120, 16, [#allocation2], [#allocation3]
        $region16: #{_lambda_.3} parent=11 // pred_fallthru
          _
      $region12: #{_lambda_.3} parent=5 // pred_fallthru
        _
      %p123 = scmp.lt.s32.totalorder %s9, 2
      // Predicated region
      $region17: #{_lambda_.3} parent=5 // pred_check
        %p124 = pneg %p123
      $region18: #{_lambda_.3} parent=5 // pred_check_branch
        %126 = sbr.rel (%p124) target = $region20
      $region19: #{_lambda_.3} parent=5 // pred_region
        // Predicated region
        $region21: #{_lambda_.3} parent=19 // pred_check
          %p127 = pneg %p64
        $region22: #{_lambda_.3} parent=19 // pred_check_branch
          %129 = sbr.rel (%p127) target = $region24
        $region23: #{_lambda_.3} parent=19 // pred_region
          %s130 = smul.u32 2, %s17
          %p131 = scmp.lt.s32.totalorder %s16, 1
          %s132 = scalar_select %p131, %s16, 1
          %p133 = scmp.lt.s32.totalorder %s130, 1
          %s134 = scalar_select %p133, %s130, 1
          %s135 = smul.addr %s132, 2
          %s136 = sadd.s32 %s134, %s135
          %s137 = scalar_lea.vmem %s1, %s136
          %s138 = smul.u32 2, %s17
        $region24: #{_lambda_.3} parent=19 // pred_fallthru
          _
      $region20: #{_lambda_.3} parent=5 // pred_fallthru
        _
      %p139 = scmp.le.s32.totalorder 1, %s9
      %p140 = scmp.lt.s32.totalorder %s9, 3
      %p141 = pnand %p139, %p140
      %p142 = pneg %p141
      // Predicated region
      $region25: #{_lambda_.3} parent=5 // pred_check
        _
      $region26: #{_lambda_.3} parent=5 // pred_check_branch
        %144 = sbr.rel (%p141) target = $region28
      $region27: #{_lambda_.3} parent=5 // pred_region
        %s145 = ssub.s32 %s9, 1
        // Predicated region
        $region29: #{_lambda_.3} parent=27 // pred_check
          %p146 = pneg %p42
        $region30: #{_lambda_.3} parent=27 // pred_check_branch
          %148 = sbr.rel (%p146) target = $region32
        $region31: #{_lambda_.3} parent=27 // pred_region
          %150 = dma.done [#allocation3], 16
        $region32: #{_lambda_.3} parent=27 // pred_fallthru
          _
        %151 = sfence
        %p152 = pneg %p42
        %p153 = pneg %p39
        %s154 = smul.u32 2, %s19
        %p155 = scmp.lt.s32.totalorder %s18, 1
        %s156 = scalar_select %p155, %s18, 1
        %p157 = scmp.lt.s32.totalorder %s154, 1
        %s158 = scalar_select %p157, %s154, 1
        %s159 = smul.addr %s156, 2
        %s160 = sadd.s32 %s158, %s159
        %s161 = scalar_lea.vmem %s1, %s160
        %p162 = pneg %p70
        %p163 = pneg %p67
        %p164 = pneg %p98
        %p165 = pneg %p95
        %s166 = smul.u32 2, %s19
        %p167 = scmp.lt.s32.totalorder %s18, 1
        %s168 = scalar_select %p167, %s18, 1
        %p169 = scmp.lt.s32.totalorder %s166, 1
        %s170 = scalar_select %p169, %s166, 1
        %s171 = smul.addr %s168, 2
        %s172 = sadd.s32 %s170, %s171
        %s173 = scalar_lea.vmem %s2, %s172
        %s174 = smul.u32 2, %s19
        %p175 = scmp.lt.s32.totalorder %s18, 1
        %s176 = scalar_select %p175, %s18, 1
        %p177 = scmp.lt.s32.totalorder %s174, 1
        %s178 = scalar_select %p177, %s174, 1
        %s179 = smul.addr %s176, 2
        %s180 = sadd.s32 %s178, %s179
        %s181 = scalar_lea.vmem %s1, %s180
        %s182 = smul.u32 2, %s19
        %s183 = smul.u32 2, %s19
        %p184 = scmp.lt.s32.totalorder %s18, 1
        %s185 = scalar_select %p184, %s18, 1
        %p186 = scmp.lt.s32.totalorder %s183, 1
        %s187 = scalar_select %p186, %s183, 1
        %s188 = smul.addr %s185, 2
        %s189 = sadd.s32 %s187, %s188
        %s190 = scalar_lea.vmem %s2, %s189
        %s191 = smul.u32 2, %s19
        %v192 = vld [vmem:[%s181] sm:$0x3]
        %s193 = sld [smem:[#allocation2]]
        %v194 = vstv %s193
        %v195 = vsub.f32 %v192, %v194
        %s196 = sld [smem:[#allocation2 + $0x1]]
        %v197 = vstv %s196
        %v198 = vmul.f32 %v195, %v197
        %v199 = vlaneseq
        %vm200 = vcmp.ge.s32.totalorder %v199, 0
        %vm201 = vcmp.lt.s32.totalorder %v199, 256
        %vm202 = vmand %vm200, %vm201
        %203 = vst.msk [vmem:[%s190] sm:$0x3] %vm202, %v198
        %s204 = smul.u32 2, %s19
        %p205 = scmp.lt.s32.totalorder %s18, 1
        %s206 = scalar_select %p205, %s18, 1
        %p207 = scmp.lt.s32.totalorder %s204, 1
        %s208 = scalar_select %p207, %s204, 1
        %s209 = smul.addr %s206, 2
        %s210 = sadd.s32 %s208, %s209
        %s211 = scalar_lea.vmem %s2, %s210
        // Predicated region
        $region33: #{_lambda_.3} parent=27 // pred_check
          %p212 = pneg %p95
        $region34: #{_lambda_.3} parent=27 // pred_check_branch
          %214 = sbr.rel (%p212) target = $region36
        $region35: #{_lambda_.3} parent=27 // pred_region
          %s215 = smul.u32 2, %s19
        $region36: #{_lambda_.3} parent=27 // pred_fallthru
          _
      $region28: #{_lambda_.3} parent=5 // pred_fallthru
        _
      %p216 = scmp.le.s32.totalorder 2, %s9
      // Predicated region
      $region37: #{_lambda_.3} parent=5 // pred_check
        %p217 = pneg %p216
      $region38: #{_lambda_.3} parent=5 // pred_check_branch
        %219 = sbr.rel (%p217) target = $region40
      $region39: #{_lambda_.3} parent=5 // pred_region
        %s220 = ssub.s32 %s9, 2
        // Predicated region
        $region41: #{_lambda_.3} parent=39 // pred_check
          %p221 = pneg %p101
        $region42: #{_lambda_.3} parent=39 // pred_check_branch
          %223 = sbr.rel (%p221) target = $region44
        $region43: #{_lambda_.3} parent=39 // pred_region
          %s224 = smul.u32 2, %s21
          %p225 = scmp.lt.s32.totalorder %s20, 1
          %s226 = scalar_select %p225, %s20, 1
          %p227 = scmp.lt.s32.totalorder %s224, 1
          %s228 = scalar_select %p227, %s224, 1
          %s229 = smul.addr %s226, 2
          %s230 = sadd.s32 %s228, %s229
          %s231 = scalar_lea.vmem %s2, %s230
        $region44: #{_lambda_.3} parent=39 // pred_fallthru
          _
      $region40: #{_lambda_.3} parent=5 // pred_fallthru
        _
    $region6: #{_lambda_.3} parent=1 // loop_footer
      %s13 = sadd.s32 1, %s9
    $region7: #{_lambda_.3} parent=1 // loop_footer_branch
      %8 = sbr.rel target = $region3
    $region8: #{_lambda_.3} parent=1 // loop_exit
      _
    %232 = vsyncpa [#allocation3], 1
    %s233 = scalar_lea.sflag [#allocation3], 1
    %234 = vsyncpa %s233, 1

// kernel: _lambda_.2
$region0: #{_lambda_.2}
  #allocation0 [shape = 'u32[]', space=smem, size = 0x4, offset = 0x4, fixed_abs, tag = 'smem constant byte address 0x4 - core index']
  #allocation1 [shape = 'u32[72,128]{1,0:T(1,128)}', space=vmem, size = 0x9000, scoped, tag = 'internal scratch']
  %s0 = inlined_call_operand.vmem [shape: f32[2,16,256], index: 0, kind: input, shape index: {}]
  %s1 = inlined_call_operand.vmem [shape: bf16[24,16], index: 1, kind: input, shape index: {}]
  %s2 = inlined_call_operand.vmem [shape: f32[24,1], index: 2, kind: input, shape index: {}, may-alias: {2,4,6}]
  %s3 = inlined_call_operand.vmem [shape: bf16[24,24], index: 3, kind: input, shape index: {}]
  %s4 = inlined_call_operand.vmem [shape: f32[24,1], index: 4, kind: input, shape index: {}, may-alias: {2,4,6}]
  %s5 = inlined_call_operand.vmem [shape: bf16[24,24], index: 5, kind: input, shape index: {}]
  %s6 = inlined_call_operand.vmem [shape: f32[24,1], index: 6, kind: input, shape index: {}, may-alias: {2,4,6}]
  %s7 = inlined_call_operand.vmem [shape: bf16[8,24], index: 7, kind: input, shape index: {}]
  %s8 = inlined_call_operand.vmem [shape: f32[8,1], index: 8, kind: input, shape index: {}]
  %s9 = inlined_call_operand.vmem [shape: f32[2,1,256], index: 9, kind: output, shape index: {0}]
  %s10 = inlined_call_operand.vmem [shape: f32[2,1,1,1], index: 10, kind: output, shape index: {1}]
  %s11 = inlined_call_operand.vmem [shape: f32[2,1,1,1], index: 11, kind: output, shape index: {2}]
  %12 = xla_tuple %s9, %s10, %s11
  %s13 = sld [smem:[#allocation0]]
  $region85: #{_lambda_.2} parent=0
    _
  %s15 = ssub.s32 1, %s13
  %s16 = scalar_select 0, %s15, %s13
  loop: start=0, step=1, limit=4
  $region2: #{_lambda_.2} parent=0 // loop_pre_header
    _
  $region3: #{_lambda_.2} parent=0 // loop_header
    %s18 = sphi 0, %s22
    %p19 = scmp.ge.s32.totalorder %s18, 4
    %s25 = sphi 0, %s37
    %s26 = sphi 0, %s33
    %s27 = sphi 0, %s25
    %s28 = sphi 0, %s26
    %s29 = sphi 0, %s27
    %s30 = sphi 0, %s28
    %s42 = sphi 0, %s44
    %s45 = sphi 0, %s42
    %s46 = sphi 0, %s45
    %s62 = sphi 0, %s46
    %s66 = sphi 0, %s66
    %s68 = sphi 0, %s66
    %s69 = sphi 0, %s68
    %s83 = sphi 0, %s69
    %s87 = sphi 0, %s87
    %s89 = sphi 0, %s87
    %s90 = sphi 0, %s89
    %s104 = sphi 0, %s90
    %s108 = sphi 0, %s108
    %s110 = sphi 0, %s108
    %s111 = sphi 0, %s110
    %s125 = sphi 0, %s111
    %s129 = sphi 0, %s129
    %s131 = sphi 0, %s129
    %s132 = sphi 0, %s131
    %s146 = sphi 0, %s132
    %s150 = sphi 0, %s150
    %s152 = sphi 0, %s150
    %s153 = sphi 0, %s152
    %s167 = sphi 0, %s153
    %s171 = sphi 0, %s171
    %s173 = sphi 0, %s171
    %s174 = sphi 0, %s173
    %s188 = sphi 0, %s174
    %s192 = sphi 0, %s192
    %s194 = sphi 0, %s192
    %s195 = sphi 0, %s194
    %s209 = sphi 0, %s195
    %s213 = sphi 0, %s213
    %s215 = sphi 0, %s213
    %s216 = sphi 0, %s215
    %s230 = sphi 0, %s216
    %s238 = sphi 0, %s240
    %s241 = sphi 0, %s238
    %s242 = sphi 0, %s241
    %s258 = sphi 0, %s242
    %s266 = sphi 0, %s268
    %s269 = sphi 0, %s266
    %s270 = sphi 0, %s269
    %s286 = sphi 0, %s270
    %s294 = sphi 0, %s296
    %s297 = sphi 0, %s294
    %s298 = sphi 0, %s297
    %s314 = sphi 0, %s298
  $region4: #{_lambda_.2} parent=0 // loop_header_branch
    %21 = sbr.rel (%p19) target = $region8
  $region5: #{_lambda_.2} parent=0 // loop_body
    %s23 = ssub.s32 %s18, 1
    %s24 = ssub.s32 %s18, 2
    %s31 = sadd.s32 1, %s26
    %p32 = scmp.ge.s32.totalorder %s31, 1
    %s33 = scalar_select %p32, 0, %s31
    %s34 = sadd.s32 1, %s25
    %s35 = scalar_select %p32, %s34, %s25
    %p36 = scmp.ge.s32.totalorder %s35, 2
    %s37 = scalar_select %p36, 0, %s35
    %s38 = ssub.s32 %s25, %s37
    %s39 = ssub.s32 %s26, %s33
    %s40 = sor.u32 %s38, %s39
    %p41 = scmp.eq.s32.totalorder %s40, 0
    %s43 = sadd.s32 %s42, 1
    %s44 = scalar_select %p41, %s42, %s43
    %p47 = pneg %p41
    %p48 = scmp.eq.s32.totalorder %s18, 1
    %p49 = por %p47, %p48
    %p50 = scmp.ne.s32.totalorder %s42, %s45
    %p51 = scmp.eq.s32.totalorder %s18, 0
    %p52 = por %p50, %p51
    %p53 = scmp.ne.s32.totalorder %s42, %s45
    %p54 = scmp.eq.s32.totalorder %s23, 1
    %p55 = por %p53, %p54
    %p56 = scmp.ne.s32.totalorder %s45, %s46
    %p57 = scmp.eq.s32.totalorder %s23, 0
    %p58 = por %p56, %p57
    %p59 = scmp.ne.s32.totalorder %s45, %s46
    %p60 = scmp.eq.s32.totalorder %s24, 1
    %p61 = por %p59, %p60
    %p63 = scmp.ne.s32.totalorder %s46, %s62
    %p64 = scmp.eq.s32.totalorder %s24, 0
    %p65 = por %p63, %p64
    %s67 = sadd.s32 %s66, 1
    %p70 = scmp.eq.s32.totalorder %s18, 1
    %p71 = scmp.ne.s32.totalorder %s66, %s68
    %p72 = scmp.eq.s32.totalorder %s18, 0
    %p73 = por %p71, %p72
    %p74 = scmp.ne.s32.totalorder %s66, %s68
    %p75 = scmp.eq.s32.totalorder %s23, 1
    %p76 = por %p74, %p75
    %p77 = scmp.ne.s32.totalorder %s68, %s69
    %p78 = scmp.eq.s32.totalorder %s23, 0
    %p79 = por %p77, %p78
    %p80 = scmp.ne.s32.totalorder %s68, %s69
    %p81 = scmp.eq.s32.totalorder %s24, 1
    %p82 = por %p80, %p81
    %p84 = scmp.ne.s32.totalorder %s69, %s83
    %p85 = scmp.eq.s32.totalorder %s24, 0
    %p86 = por %p84, %p85
    %s88 = sadd.s32 %s87, 1
    %p91 = scmp.eq.s32.totalorder %s18, 1
    %p92 = scmp.ne.s32.totalorder %s87, %s89
    %p93 = scmp.eq.s32.totalorder %s18, 0
    %p94 = por %p92, %p93
    %p95 = scmp.ne.s32.totalorder %s87, %s89
    %p96 = scmp.eq.s32.totalorder %s23, 1
    %p97 = por %p95, %p96
    %p98 = scmp.ne.s32.totalorder %s89, %s90
    %p99 = scmp.eq.s32.totalorder %s23, 0
    %p100 = por %p98, %p99
    %p101 = scmp.ne.s32.totalorder %s89, %s90
    %p102 = scmp.eq.s32.totalorder %s24, 1
    %p103 = por %p101, %p102
    %p105 = scmp.ne.s32.totalorder %s90, %s104
    %p106 = scmp.eq.s32.totalorder %s24, 0
    %p107 = por %p105, %p106
    %s109 = sadd.s32 %s108, 1
    %p112 = scmp.eq.s32.totalorder %s18, 1
    %p113 = scmp.ne.s32.totalorder %s108, %s110
    %p114 = scmp.eq.s32.totalorder %s18, 0
    %p115 = por %p113, %p114
    %p116 = scmp.ne.s32.totalorder %s108, %s110
    %p117 = scmp.eq.s32.totalorder %s23, 1
    %p118 = por %p116, %p117
    %p119 = scmp.ne.s32.totalorder %s110, %s111
    %p120 = scmp.eq.s32.totalorder %s23, 0
    %p121 = por %p119, %p120
    %p122 = scmp.ne.s32.totalorder %s110, %s111
    %p123 = scmp.eq.s32.totalorder %s24, 1
    %p124 = por %p122, %p123
    %p126 = scmp.ne.s32.totalorder %s111, %s125
    %p127 = scmp.eq.s32.totalorder %s24, 0
    %p128 = por %p126, %p127
    %s130 = sadd.s32 %s129, 1
    %p133 = scmp.eq.s32.totalorder %s18, 1
    %p134 = scmp.ne.s32.totalorder %s129, %s131
    %p135 = scmp.eq.s32.totalorder %s18, 0
    %p136 = por %p134, %p135
    %p137 = scmp.ne.s32.totalorder %s129, %s131
    %p138 = scmp.eq.s32.totalorder %s23, 1
    %p139 = por %p137, %p138
    %p140 = scmp.ne.s32.totalorder %s131, %s132
    %p141 = scmp.eq.s32.totalorder %s23, 0
    %p142 = por %p140, %p141
    %p143 = scmp.ne.s32.totalorder %s131, %s132
    %p144 = scmp.eq.s32.totalorder %s24, 1
    %p145 = por %p143, %p144
    %p147 = scmp.ne.s32.totalorder %s132, %s146
    %p148 = scmp.eq.s32.totalorder %s24, 0
    %p149 = por %p147, %p148
    %s151 = sadd.s32 %s150, 1
    %p154 = scmp.eq.s32.totalorder %s18, 1
    %p155 = scmp.ne.s32.totalorder %s150, %s152
    %p156 = scmp.eq.s32.totalorder %s18, 0
    %p157 = por %p155, %p156
    %p158 = scmp.ne.s32.totalorder %s150, %s152
    %p159 = scmp.eq.s32.totalorder %s23, 1
    %p160 = por %p158, %p159
    %p161 = scmp.ne.s32.totalorder %s152, %s153
    %p162 = scmp.eq.s32.totalorder %s23, 0
    %p163 = por %p161, %p162
    %p164 = scmp.ne.s32.totalorder %s152, %s153
    %p165 = scmp.eq.s32.totalorder %s24, 1
    %p166 = por %p164, %p165
    %p168 = scmp.ne.s32.totalorder %s153, %s167
    %p169 = scmp.eq.s32.totalorder %s24, 0
    %p170 = por %p168, %p169
    %s172 = sadd.s32 %s171, 1
    %p175 = scmp.eq.s32.totalorder %s18, 1
    %p176 = scmp.ne.s32.totalorder %s171, %s173
    %p177 = scmp.eq.s32.totalorder %s18, 0
    %p178 = por %p176, %p177
    %p179 = scmp.ne.s32.totalorder %s171, %s173
    %p180 = scmp.eq.s32.totalorder %s23, 1
    %p181 = por %p179, %p180
    %p182 = scmp.ne.s32.totalorder %s173, %s174
    %p183 = scmp.eq.s32.totalorder %s23, 0
    %p184 = por %p182, %p183
    %p185 = scmp.ne.s32.totalorder %s173, %s174
    %p186 = scmp.eq.s32.totalorder %s24, 1
    %p187 = por %p185, %p186
    %p189 = scmp.ne.s32.totalorder %s174, %s188
    %p190 = scmp.eq.s32.totalorder %s24, 0
    %p191 = por %p189, %p190
    %s193 = sadd.s32 %s192, 1
    %p196 = scmp.eq.s32.totalorder %s18, 1
    %p197 = scmp.ne.s32.totalorder %s192, %s194
    %p198 = scmp.eq.s32.totalorder %s18, 0
    %p199 = por %p197, %p198
    %p200 = scmp.ne.s32.totalorder %s192, %s194
    %p201 = scmp.eq.s32.totalorder %s23, 1
    %p202 = por %p200, %p201
    %p203 = scmp.ne.s32.totalorder %s194, %s195
    %p204 = scmp.eq.s32.totalorder %s23, 0
    %p205 = por %p203, %p204
    %p206 = scmp.ne.s32.totalorder %s194, %s195
    %p207 = scmp.eq.s32.totalorder %s24, 1
    %p208 = por %p206, %p207
    %p210 = scmp.ne.s32.totalorder %s195, %s209
    %p211 = scmp.eq.s32.totalorder %s24, 0
    %p212 = por %p210, %p211
    %s214 = sadd.s32 %s213, 1
    %p217 = scmp.eq.s32.totalorder %s18, 1
    %p218 = scmp.ne.s32.totalorder %s213, %s215
    %p219 = scmp.eq.s32.totalorder %s18, 0
    %p220 = por %p218, %p219
    %p221 = scmp.ne.s32.totalorder %s213, %s215
    %p222 = scmp.eq.s32.totalorder %s23, 1
    %p223 = por %p221, %p222
    %p224 = scmp.ne.s32.totalorder %s215, %s216
    %p225 = scmp.eq.s32.totalorder %s23, 0
    %p226 = por %p224, %p225
    %p227 = scmp.ne.s32.totalorder %s215, %s216
    %p228 = scmp.eq.s32.totalorder %s24, 1
    %p229 = por %p227, %p228
    %p231 = scmp.ne.s32.totalorder %s216, %s230
    %p232 = scmp.eq.s32.totalorder %s24, 0
    %p233 = por %p231, %p232
    %s234 = ssub.s32 %s25, %s37
    %s235 = ssub.s32 %s26, %s33
    %s236 = sor.u32 %s234, %s235
    %p237 = scmp.eq.s32.totalorder %s236, 0
    %s239 = sadd.s32 %s238, 1
    %s240 = scalar_select %p237, %s238, %s239
    %p243 = pneg %p237
    %p244 = scmp.eq.s32.totalorder %s18, 1
    %p245 = por %p243, %p244
    %p246 = scmp.ne.s32.totalorder %s238, %s241
    %p247 = scmp.eq.s32.totalorder %s18, 0
    %p248 = por %p246, %p247
    %p249 = scmp.ne.s32.totalorder %s238, %s241
    %p250 = scmp.eq.s32.totalorder %s23, 1
    %p251 = por %p249, %p250
    %p252 = scmp.ne.s32.totalorder %s241, %s242
    %p253 = scmp.eq.s32.totalorder %s23, 0
    %p254 = por %p252, %p253
    %p255 = scmp.ne.s32.totalorder %s241, %s242
    %p256 = scmp.eq.s32.totalorder %s24, 1
    %p257 = por %p255, %p256
    %p259 = scmp.ne.s32.totalorder %s242, %s258
    %p260 = scmp.eq.s32.totalorder %s24, 0
    %p261 = por %p259, %p260
    %s262 = ssub.s32 %s25, %s37
    %s263 = ssub.s32 %s26, %s33
    %s264 = sor.u32 %s262, %s263
    %p265 = scmp.eq.s32.totalorder %s264, 0
    %s267 = sadd.s32 %s266, 1
    %s268 = scalar_select %p265, %s266, %s267
    %p271 = pneg %p265
    %p272 = scmp.eq.s32.totalorder %s18, 1
    %p273 = por %p271, %p272
    %p274 = scmp.ne.s32.totalorder %s266, %s269
    %p275 = scmp.eq.s32.totalorder %s18, 0
    %p276 = por %p274, %p275
    %p277 = scmp.ne.s32.totalorder %s266, %s269
    %p278 = scmp.eq.s32.totalorder %s23, 1
    %p279 = por %p277, %p278
    %p280 = scmp.ne.s32.totalorder %s269, %s270
    %p281 = scmp.eq.s32.totalorder %s23, 0
    %p282 = por %p280, %p281
    %p283 = scmp.ne.s32.totalorder %s269, %s270
    %p284 = scmp.eq.s32.totalorder %s24, 1
    %p285 = por %p283, %p284
    %p287 = scmp.ne.s32.totalorder %s270, %s286
    %p288 = scmp.eq.s32.totalorder %s24, 0
    %p289 = por %p287, %p288
    %s290 = ssub.s32 %s25, %s37
    %s291 = ssub.s32 %s26, %s33
    %s292 = sor.u32 %s290, %s291
    %p293 = scmp.eq.s32.totalorder %s292, 0
    %s295 = sadd.s32 %s294, 1
    %s296 = scalar_select %p293, %s294, %s295
    %p299 = pneg %p293
    %p300 = scmp.eq.s32.totalorder %s18, 1
    %p301 = por %p299, %p300
    %p302 = scmp.ne.s32.totalorder %s294, %s297
    %p303 = scmp.eq.s32.totalorder %s18, 0
    %p304 = por %p302, %p303
    %p305 = scmp.ne.s32.totalorder %s294, %s297
    %p306 = scmp.eq.s32.totalorder %s23, 1
    %p307 = por %p305, %p306
    %p308 = scmp.ne.s32.totalorder %s297, %s298
    %p309 = scmp.eq.s32.totalorder %s23, 0
    %p310 = por %p308, %p309
    %p311 = scmp.ne.s32.totalorder %s297, %s298
    %p312 = scmp.eq.s32.totalorder %s24, 1
    %p313 = por %p311, %p312
    %p315 = scmp.ne.s32.totalorder %s298, %s314
    %p316 = scmp.eq.s32.totalorder %s24, 0
    %p317 = por %p315, %p316
    %p318 = scmp.le.s32.totalorder 1, %s18
    %p319 = scmp.lt.s32.totalorder %s18, 3
    %p320 = pnand %p318, %p319
    %p321 = pneg %p320
    // Predicated region
    $region9: #{_lambda_.2} parent=5 // pred_check
      _
    $region10: #{_lambda_.2} parent=5 // pred_check_branch
      %323 = sbr.rel (%p320) target = $region12
    $region11: #{_lambda_.2} parent=5 // pred_region
      %s324 = ssub.s32 %s18, 1
      // Predicated region
      $region13: #{_lambda_.2} parent=11 // pred_check
        %p325 = pneg %p79
      $region14: #{_lambda_.2} parent=11 // pred_check_branch
        %327 = sbr.rel (%p325) target = $region16
      $region15: #{_lambda_.2} parent=11 // pred_region
        _
      $region16: #{_lambda_.2} parent=11 // pred_fallthru
        _
      // Predicated region
      $region17: #{_lambda_.2} parent=11 // pred_check
        %p328 = pneg %p100
      $region18: #{_lambda_.2} parent=11 // pred_check_branch
        %330 = sbr.rel (%p328) target = $region20
      $region19: #{_lambda_.2} parent=11 // pred_region
        _
      $region20: #{_lambda_.2} parent=11 // pred_fallthru
        _
      // Predicated region
      $region21: #{_lambda_.2} parent=11 // pred_check
        %p331 = pneg %p121
      $region22: #{_lambda_.2} parent=11 // pred_check_branch
        %333 = sbr.rel (%p331) target = $region24
      $region23: #{_lambda_.2} parent=11 // pred_region
        _
      $region24: #{_lambda_.2} parent=11 // pred_fallthru
        _
      // Predicated region
      $region25: #{_lambda_.2} parent=11 // pred_check
        %p334 = pneg %p142
      $region26: #{_lambda_.2} parent=11 // pred_check_branch
        %336 = sbr.rel (%p334) target = $region28
      $region27: #{_lambda_.2} parent=11 // pred_region
        _
      $region28: #{_lambda_.2} parent=11 // pred_fallthru
        _
      // Predicated region
      $region29: #{_lambda_.2} parent=11 // pred_check
        %p337 = pneg %p163
      $region30: #{_lambda_.2} parent=11 // pred_check_branch
        %339 = sbr.rel (%p337) target = $region32
      $region31: #{_lambda_.2} parent=11 // pred_region
        _
      $region32: #{_lambda_.2} parent=11 // pred_fallthru
        _
      // Predicated region
      $region33: #{_lambda_.2} parent=11 // pred_check
        %p340 = pneg %p184
      $region34: #{_lambda_.2} parent=11 // pred_check_branch
        %342 = sbr.rel (%p340) target = $region36
      $region35: #{_lambda_.2} parent=11 // pred_region
        _
      $region36: #{_lambda_.2} parent=11 // pred_fallthru
        _
      // Predicated region
      $region37: #{_lambda_.2} parent=11 // pred_check
        %p343 = pneg %p205
      $region38: #{_lambda_.2} parent=11 // pred_check_branch
        %345 = sbr.rel (%p343) target = $region40
      $region39: #{_lambda_.2} parent=11 // pred_region
        _
      $region40: #{_lambda_.2} parent=11 // pred_fallthru
        _
      // Predicated region
      $region41: #{_lambda_.2} parent=11 // pred_check
        %p346 = pneg %p226
      $region42: #{_lambda_.2} parent=11 // pred_check_branch
        %348 = sbr.rel (%p346) target = $region44
      $region43: #{_lambda_.2} parent=11 // pred_region
        _
      $region44: #{_lambda_.2} parent=11 // pred_fallthru
        _
    $region12: #{_lambda_.2} parent=5 // pred_fallthru
      _
    %p349 = scmp.lt.s32.totalorder %s18, 2
    // Predicated region
    $region45: #{_lambda_.2} parent=5 // pred_check
      %p350 = pneg %p349
    $region46: #{_lambda_.2} parent=5 // pred_check_branch
      %352 = sbr.rel (%p350) target = $region48
    $region47: #{_lambda_.2} parent=5 // pred_region
      // Predicated region
      $region49: #{_lambda_.2} parent=47 // pred_check
        %p353 = pneg %p52
      $region50: #{_lambda_.2} parent=47 // pred_check_branch
        %355 = sbr.rel (%p353) target = $region52
      $region51: #{_lambda_.2} parent=47 // pred_region
        %s356 = smul.u32 2, %s26
        %p357 = scmp.lt.s32.totalorder %s25, 1
        %s358 = scalar_select %p357, %s25, 1
        %p359 = scmp.lt.s32.totalorder %s356, 1
        %s360 = scalar_select %p359, %s356, 1
        %s361 = smul.addr %s358, 4
        %s362 = sadd.s32 %s360, %s361
        %s363 = smul.addr %s362, 8
        %s364 = scalar_lea.vmem %s0, %s363
        %s365 = smul.u32 2, %s26
      $region52: #{_lambda_.2} parent=47 // pred_fallthru
        _
    $region48: #{_lambda_.2} parent=5 // pred_fallthru
      _
    %p366 = scmp.le.s32.totalorder 1, %s18
    %p367 = scmp.lt.s32.totalorder %s18, 3
    %p368 = pnand %p366, %p367
    %p369 = pneg %p368
    // Predicated region
    $region53: #{_lambda_.2} parent=5 // pred_check
      _
    $region54: #{_lambda_.2} parent=5 // pred_check_branch
      %371 = sbr.rel (%p368) target = $region56
    $region55: #{_lambda_.2} parent=5 // pred_region
      %s372 = ssub.s32 %s18, 1
      %s373 = smul.u32 2, %s28
      %p374 = scmp.lt.s32.totalorder %s27, 1
      %s375 = scalar_select %p374, %s27, 1
      %p376 = scmp.lt.s32.totalorder %s373, 1
      %s377 = scalar_select %p376, %s373, 1
      %s378 = smul.addr %s375, 4
      %s379 = sadd.s32 %s377, %s378
      %s380 = smul.addr %s379, 8
      %s381 = scalar_lea.vmem %s0, %s380
      %p382 = pneg %p58
      %p383 = pneg %p55
      %p384 = pneg %p79
      %p385 = pneg %p76
      %p386 = pneg %p100
      %p387 = pneg %p97
      %p388 = pneg %p121
      %p389 = pneg %p118
      %p390 = pneg %p142
      %p391 = pneg %p139
      %p392 = pneg %p163
      %p393 = pneg %p160
      %p394 = pneg %p184
      %p395 = pneg %p181
      %p396 = pneg %p205
      %p397 = pneg %p202
      %p398 = pneg %p226
      %p399 = pneg %p223
      %p400 = pneg %p254
      %p401 = pneg %p251
      %s402 = smul.u32 2, %s28
      %p403 = scmp.lt.s32.totalorder %s27, 1
      %s404 = scalar_select %p403, %s27, 1
      %p405 = scmp.lt.s32.totalorder %s402, 1
      %s406 = scalar_select %p405, %s402, 1
      %s407 = smul.addr %s404, 2
      %s408 = sadd.s32 %s406, %s407
      %s409 = scalar_lea.vmem %s9, %s408
      %p410 = pneg %p282
      %p411 = pneg %p279
      %p412 = scmp.lt.s32.totalorder %s27, 1
      %s413 = scalar_select %p412, %s27, 1
      %p414 = scmp.lt.s32.totalorder %s28, 0
      %s415 = scalar_select %p414, %s28, 0
      %s416 = sadd.s32 %s415, %s413
      %s417 = scalar_lea.vmem %s10, %s416
      %p418 = pneg %p310
      %p419 = pneg %p307
      %p420 = scmp.lt.s32.totalorder %s27, 1
      %s421 = scalar_select %p420, %s27, 1
      %p422 = scmp.lt.s32.totalorder %s28, 0
      %s423 = scalar_select %p422, %s28, 0
      %s424 = sadd.s32 %s423, %s421
      %s425 = scalar_lea.vmem %s11, %s424
      %s426 = smul.u32 2, %s28
      %p427 = scmp.lt.s32.totalorder %s27, 1
      %s428 = scalar_select %p427, %s27, 1
      %p429 = scmp.lt.s32.totalorder %s426, 1
      %s430 = scalar_select %p429, %s426, 1
      %s431 = smul.addr %s428, 4
      %s432 = sadd.s32 %s430, %s431
      %s433 = smul.addr %s432, 8
      %s434 = scalar_lea.vmem %s0, %s433
      %s435 = smul.u32 2, %s28
      %s436 = smul.u32 2, %s28
      %p437 = scmp.lt.s32.totalorder %s27, 1
      %s438 = scalar_select %p437, %s27, 1
      %p439 = scmp.lt.s32.totalorder %s436, 1
      %s440 = scalar_select %p439, %s436, 1
      %s441 = smul.addr %s438, 2
      %s442 = sadd.s32 %s440, %s441
      %s443 = scalar_lea.vmem %s9, %s442
      %s444 = smul.u32 2, %s28
      %p445 = scmp.lt.s32.totalorder %s27, 1
      %s446 = scalar_select %p445, %s27, 1
      %p447 = scmp.lt.s32.totalorder %s28, 0
      %s448 = scalar_select %p447, %s28, 0
      %s449 = sadd.s32 %s448, %s446
      %s450 = scalar_lea.vmem %s10, %s449
      %p451 = scmp.lt.s32.totalorder %s27, 1
      %s452 = scalar_select %p451, %s27, 1
      %p453 = scmp.lt.s32.totalorder %s28, 0
      %s454 = scalar_select %p453, %s28, 0
      %s455 = sadd.s32 %s454, %s452
      %s456 = scalar_lea.vmem %s11, %s455
      %v458 = vld [vmem:[%s434] sm:$0xff]
      %v459 = vld [vmem:[%s434 + $0x8] sm:$0xff]
      %v460 = vld [vmem:[%s434 + $0x10] sm:$0xff]
      %v461 = vld [vmem:[%s434 + $0x18] sm:$0xff]
      %v462 = vld [vmem:[%s1] sm:$0xf]
      %v463 = vld [vmem:[%s1 + $0x4] sm:$0xf]
      %v464 = vld [vmem:[%s1 + $0x8] sm:$0xf]
      %v465 = vpack.c.bf16 %v460, %v458
      %v466 = vpack.c.bf16 %v461, %v459
      %v467 = vld [vmem:[%s2] sm:$0xff]
      %v468 = vld [vmem:[%s2 + $0x8] sm:$0xff]
      %v469 = vld [vmem:[%s2 + $0x10] sm:$0xff]
      %471 = vset.pattern.permute.xlu0 0
      %472 = vperm.xlu0 %471, %v467
      %v473 = vpop.permute.xlu0 %472
      %476 = vset.pattern.permute.xlu0 0
      %477 = vperm.xlu0 %476, %v468
      %v478 = vpop.permute.xlu0 %477
      %481 = vset.pattern.permute.xlu0 0
      %482 = vperm.xlu0 %481, %v469
      %v483 = vpop.permute.xlu0 %482
      %v488 = vunpack.c.l.b16 %v462
      %v489 = vunpack.c.l.b16 %v463
      %v490 = vunpack.c.l.b16 %v464
      %v491 = vpack.c.b16 %v489, %v488
      %v492 = vpack.c.b16 %v490, %v490
      %vm493 = vcmask 130048
      %v495 = vsel %vm493, %v491, 0
      %v498 = vsel %vm493, %v492, 0
      %500 = vmatpush.bf16.msra.mxu0 0
      %501 = vmatpush.bf16.msra.mxu0 0
      %502 = vmatpush.bf16.msra.mxu0 0
      %503 = vmatpush.bf16.msra.mxu0 0
      %504 = vmatpush.bf16.msra.mxu0 0
      %505 = vmatpush.bf16.msra.mxu0 0
      %506 = vmatpush.bf16.msra.mxu0 0
      %507 = vmatpush.bf16.msra.mxu0 %v465
      %508 = vmatmul.bf16.gmra.mxu0 %v495
      %v509 = vpop.f32.mrf.mxu0
      %v510 = vadd.f32 %v473, %v509
      %v511 = vpop.f32.mrf.mxu0
      %v512 = vadd.f32 %v478, %v511
      %513 = vmatmul.bf16.gmra.mxu0 %v498
      %v514 = vpop.f32.mrf.mxu0
      %v515 = vadd.f32 %v483, %v514
      %v516 = vpop.f32.mrf.mxu0
      %517 = vdwg.mxu0
      %518 = vmatpush.bf16.msra.mxu0 0
      %519 = vmatpush.bf16.msra.mxu0 0
      %520 = vmatpush.bf16.msra.mxu0 0
      %521 = vmatpush.bf16.msra.mxu0 0
      %522 = vmatpush.bf16.msra.mxu0 0
      %523 = vmatpush.bf16.msra.mxu0 0
      %524 = vmatpush.bf16.msra.mxu0 0
      %525 = vmatpush.bf16.msra.mxu0 %v466
      %526 = vmatmul.bf16.gmra.mxu0 %v495
      %v527 = vpop.f32.mrf.mxu0
      %v528 = vadd.f32 %v473, %v527
      %v529 = vpop.f32.mrf.mxu0
      %v530 = vadd.f32 %v478, %v529
      %531 = vmatmul.bf16.gmra.mxu0 %v498
      %v532 = vpop.f32.mrf.mxu0
      %v533 = vadd.f32 %v483, %v532
      %v534 = vpop.f32.mrf.mxu0
      %535 = vdwg.mxu0
      %v536 = vmul.f32 %v510, 0.01
      %v537 = vmul.f32 %v528, 0.01
      %v538 = vmul.f32 %v512, 0.01
      %v539 = vmul.f32 %v530, 0.01
      %v540 = vmul.f32 %v515, 0.01
      %v541 = vmul.f32 %v533, 0.01
      %v542 = vmax.f32 %v510, %v536
      %v543 = vmax.f32 %v528, %v537
      %v544 = vmax.f32 %v512, %v538
      %v545 = vmax.f32 %v530, %v539
      %v546 = vmax.f32 %v515, %v540
      %v547 = vmax.f32 %v533, %v541
      %v548 = vld [vmem:[%s3] sm:$0xf]
      %v549 = vld [vmem:[%s3 + $0x4] sm:$0xf]
      %v550 = vld [vmem:[%s3 + $0x8] sm:$0xf]
      %v551 = vpack.c.bf16 %v544, %v542
      %v552 = vpack.c.bf16 %v545, %v543
      %v553 = vpack.c.bf16 %v546, %v546
      %v554 = vpack.c.bf16 %v547, %v547
      %v555 = vld [vmem:[%s4] sm:$0xff]
      %v556 = vld [vmem:[%s4 + $0x8] sm:$0xff]
      %v557 = vld [vmem:[%s4 + $0x10] sm:$0xff]
      %559 = vset.pattern.permute.xlu0 0
      %560 = vperm.xlu0 %559, %v555
      %v561 = vpop.permute.xlu0 %560
      %564 = vset.pattern.permute.xlu0 0
      %565 = vperm.xlu0 %564, %v556
      %v566 = vpop.permute.xlu0 %565
      %569 = vset.pattern.permute.xlu0 0
      %570 = vperm.xlu0 %569, %v557
      %v571 = vpop.permute.xlu0 %570
      %v576 = vunpack.c.l.b16 %v548
      %v577 = vunpack.c.l.b16 %v549
      %v578 = vunpack.c.l.b16 %v550
      %v579 = vpack.c.b16 %v577, %v576
      %v580 = vpack.c.b16 %v578, %v578
      %vm581 = vcmask 195584
      %v583 = vsel %vm581, %v579, 0
      %v586 = vsel %vm581, %v580, 0
      %vm588 = vcmask 1043456
      %v590 = vsel %vm588, %v553, 0
      %v593 = vsel %vm588, %v554, 0
      %595 = vmatpush.bf16.msra.mxu0 0
      %596 = vmatpush.bf16.msra.mxu0 0
      %597 = vmatpush.bf16.msra.mxu0 0
      %598 = vmatpush.bf16.msra.mxu0 0
      %599 = vmatpush.bf16.msra.mxu0 0
      %600 = vmatpush.bf16.msra.mxu0 0
      %601 = vmatpush.bf16.msra.mxu0 %v590
      %602 = vmatpush.bf16.msra.mxu0 %v551
      %603 = vmatmul.bf16.gmra.mxu0 %v583
      %v604 = vpop.f32.mrf.mxu0
      %v605 = vadd.f32 %v561, %v604
      %v606 = vpop.f32.mrf.mxu0
      %v607 = vadd.f32 %v566, %v606
      %608 = vmatmul.bf16.gmra.mxu0 %v586
      %v609 = vpop.f32.mrf.mxu0
      %v610 = vadd.f32 %v571, %v609
      %v611 = vpop.f32.mrf.mxu0
      %612 = vdwg.mxu0
      %613 = vmatpush.bf16.msra.mxu0 0
      %614 = vmatpush.bf16.msra.mxu0 0
      %615 = vmatpush.bf16.msra.mxu0 0
      %616 = vmatpush.bf16.msra.mxu0 0
      %617 = vmatpush.bf16.msra.mxu0 0
      %618 = vmatpush.bf16.msra.mxu0 0
      %619 = vmatpush.bf16.msra.mxu0 %v593
      %620 = vmatpush.bf16.msra.mxu0 %v552
      %621 = vmatmul.bf16.gmra.mxu0 %v583
      %v622 = vpop.f32.mrf.mxu0
      %v623 = vadd.f32 %v561, %v622
      %v624 = vpop.f32.mrf.mxu0
      %v625 = vadd.f32 %v566, %v624
      %626 = vmatmul.bf16.gmra.mxu0 %v586
      %v627 = vpop.f32.mrf.mxu0
      %v628 = vadd.f32 %v571, %v627
      %v629 = vpop.f32.mrf.mxu0
      %630 = vdwg.mxu0
      %v631 = vmul.f32 %v605, 0.01
      %v632 = vmul.f32 %v623, 0.01
      %v633 = vmul.f32 %v607, 0.01
      %v634 = vmul.f32 %v625, 0.01
      %v635 = vmul.f32 %v610, 0.01
      %v636 = vmul.f32 %v628, 0.01
      %v637 = vmax.f32 %v605, %v631
      %v638 = vmax.f32 %v623, %v632
      %v639 = vmax.f32 %v607, %v633
      %v640 = vmax.f32 %v625, %v634
      %v641 = vmax.f32 %v610, %v635
      %v642 = vmax.f32 %v628, %v636
      %v643 = vld [vmem:[%s5] sm:$0xf]
      %v644 = vld [vmem:[%s5 + $0x4] sm:$0xf]
      %v645 = vld [vmem:[%s5 + $0x8] sm:$0xf]
      %v646 = vpack.c.bf16 %v639, %v637
      %v647 = vpack.c.bf16 %v640, %v638
      %v648 = vpack.c.bf16 %v641, %v641
      %v649 = vpack.c.bf16 %v642, %v642
      %v650 = vld [vmem:[%s6] sm:$0xff]
      %v651 = vld [vmem:[%s6 + $0x8] sm:$0xff]
      %v652 = vld [vmem:[%s6 + $0x10] sm:$0xff]
      %654 = vset.pattern.permute.xlu0 0
      %655 = vperm.xlu0 %654, %v650
      %v656 = vpop.permute.xlu0 %655
      %659 = vset.pattern.permute.xlu0 0
      %660 = vperm.xlu0 %659, %v651
      %v661 = vpop.permute.xlu0 %660
      %664 = vset.pattern.permute.xlu0 0
      %665 = vperm.xlu0 %664, %v652
      %v666 = vpop.permute.xlu0 %665
      %v671 = vunpack.c.l.b16 %v643
      %v672 = vunpack.c.l.b16 %v644
      %v673 = vunpack.c.l.b16 %v645
      %v674 = vpack.c.b16 %v672, %v671
      %v675 = vpack.c.b16 %v673, %v673
      %v677 = vsel %vm581, %v674, 0
      %v680 = vsel %vm581, %v675, 0
      %v683 = vsel %vm588, %v648, 0
      %v686 = vsel %vm588, %v649, 0
      %688 = vmatpush.bf16.msra.mxu0 0
      %689 = vmatpush.bf16.msra.mxu0 0
      %690 = vmatpush.bf16.msra.mxu0 0
      %691 = vmatpush.bf16.msra.mxu0 0
      %692 = vmatpush.bf16.msra.mxu0 0
      %693 = vmatpush.bf16.msra.mxu0 0
      %694 = vmatpush.bf16.msra.mxu0 %v683
      %695 = vmatpush.bf16.msra.mxu0 %v646
      %696 = vmatmul.bf16.gmra.mxu0 %v677
      %v697 = vpop.f32.mrf.mxu0
      %v698 = vadd.f32 %v656, %v697
      %v699 = vpop.f32.mrf.mxu0
      %v700 = vadd.f32 %v661, %v699
      %701 = vmatmul.bf16.gmra.mxu0 %v680
      %v702 = vpop.f32.mrf.mxu0
      %v703 = vadd.f32 %v666, %v702
      %v704 = vpop.f32.mrf.mxu0
      %705 = vdwg.mxu0
      %706 = vmatpush.bf16.msra.mxu0 0
      %707 = vmatpush.bf16.msra.mxu0 0
      %708 = vmatpush.bf16.msra.mxu0 0
      %709 = vmatpush.bf16.msra.mxu0 0
      %710 = vmatpush.bf16.msra.mxu0 0
      %711 = vmatpush.bf16.msra.mxu0 0
      %712 = vmatpush.bf16.msra.mxu0 %v686
      %713 = vmatpush.bf16.msra.mxu0 %v647
      %714 = vmatmul.bf16.gmra.mxu0 %v677
      %v715 = vpop.f32.mrf.mxu0
      %v716 = vadd.f32 %v656, %v715
      %v717 = vpop.f32.mrf.mxu0
      %v718 = vadd.f32 %v661, %v717
      %719 = vmatmul.bf16.gmra.mxu0 %v680
      %v720 = vpop.f32.mrf.mxu0
      %v721 = vadd.f32 %v666, %v720
      %v722 = vpop.f32.mrf.mxu0
      %723 = vdwg.mxu0
      %v724 = vmul.f32 %v698, 0.01
      %v725 = vmul.f32 %v716, 0.01
      %v726 = vmul.f32 %v700, 0.01
      %v727 = vmul.f32 %v718, 0.01
      %v728 = vmul.f32 %v703, 0.01
      %v729 = vmul.f32 %v721, 0.01
      %v730 = vmax.f32 %v698, %v724
      %v731 = vmax.f32 %v716, %v725
      %v732 = vmax.f32 %v700, %v726
      %v733 = vmax.f32 %v718, %v727
      %v734 = vmax.f32 %v703, %v728
      %v735 = vmax.f32 %v721, %v729
      %v736 = vld [vmem:[%s7] sm:$0xf]
      %v737 = vpack.c.bf16 %v732, %v730
      %v738 = vpack.c.bf16 %v733, %v731
      %v739 = vpack.c.bf16 %v734, %v734
      %v740 = vpack.c.bf16 %v735, %v735
      %v741 = vld [vmem:[%s8] sm:$0xff]
      %743 = vset.pattern.permute.xlu0 0
      %744 = vperm.xlu0 %743, %v741
      %v745 = vpop.permute.xlu0 %744
      %v748 = vsel %vm581, %v736, 0
      %v751 = vsel %vm588, %v739, 0
      %v754 = vsel %vm588, %v740, 0
      %756 = vmatpush.bf16.msra.mxu0 0
      %757 = vmatpush.bf16.msra.mxu0 0
      %758 = vmatpush.bf16.msra.mxu0 0
      %759 = vmatpush.bf16.msra.mxu0 0
      %760 = vmatpush.bf16.msra.mxu0 0
      %761 = vmatpush.bf16.msra.mxu0 0
      %762 = vmatpush.bf16.msra.mxu0 %v751
      %763 = vmatpush.bf16.msra.mxu0 %v737
      %764 = vmatmul.bf16.gmra.mxu0 %v748
      %v765 = vpop.f32.mrf.mxu0
      %v766 = vadd.f32 %v745, %v765
      %v767 = vpop.f32.mrf.mxu0
      %768 = vdwg.mxu0
      %769 = vmatpush.bf16.msra.mxu0 0
      %770 = vmatpush.bf16.msra.mxu0 0
      %771 = vmatpush.bf16.msra.mxu0 0
      %772 = vmatpush.bf16.msra.mxu0 0
      %773 = vmatpush.bf16.msra.mxu0 0
      %774 = vmatpush.bf16.msra.mxu0 0
      %775 = vmatpush.bf16.msra.mxu0 %v754
      %776 = vmatpush.bf16.msra.mxu0 %v738
      %777 = vmatmul.bf16.gmra.mxu0 %v748
      %v778 = vpop.f32.mrf.mxu0
      %v779 = vadd.f32 %v745, %v778
      %v780 = vpop.f32.mrf.mxu0
      %781 = vdwg.mxu0
      %v782 = vmul.f32 %v766, 0.01
      %v783 = vmul.f32 %v779, 0.01
      %v784 = vmax.f32 %v766, %v782
      %v785 = vmax.f32 %v779, %v783
      %v788 = vrot.slane %v785, 7
      %vm789 = vcmask 1040384
      %v790 = vsel %vm789, %v784, %v788
      %v792 = vlaneseq
      %vm793 = vcmp.ge.s32.totalorder %v792, 0
      %vm794 = vcmp.lt.s32.totalorder %v792, 256
      %vm795 = vmand %vm793, %vm794
      %796 = vst.msk [vmem:[%s443] sm:$0x3] %vm795, %v790
      %v797 = vsel %vm789, %v784, 0.0
      %v798 = vsel %vm789, %v785, 0.0
      %v799 = vadd.f32 %v797, %v798
      %800 = vadd.xlane.f32.xlu0 %v799
      %v801 = vpop.xlane.xlu0 %800
      %v802 = vadd.f32 %v801, 0.0
      %vm803 = vcmask 0
      %804 = vst.msk [vmem:[%s450] sm:$0x1] %vm803, %v802
      %v805 = vmul.f32 %v784, %v784
      %v806 = vmul.f32 %v785, %v785
      %v807 = vsel %vm789, %v805, 0.0
      %v808 = vsel %vm789, %v806, 0.0
      %v809 = vadd.f32 %v807, %v808
      %810 = vadd.xlane.f32.xlu0 %v809
      %v811 = vpop.xlane.xlu0 %810
      %v812 = vadd.f32 %v811, 0.0
      %813 = vst.msk [vmem:[%s456] sm:$0x1] %vm803, %v812
      %s814 = smul.u32 2, %s28
      %p815 = scmp.lt.s32.totalorder %s27, 1
      %s816 = scalar_select %p815, %s27, 1
      %p817 = scmp.lt.s32.totalorder %s814, 1
      %s818 = scalar_select %p817, %s814, 1
      %s819 = smul.addr %s816, 2
      %s820 = sadd.s32 %s818, %s819
      %s821 = scalar_lea.vmem %s9, %s820
      %p822 = scmp.lt.s32.totalorder %s27, 1
      %s823 = scalar_select %p822, %s27, 1
      %p824 = scmp.lt.s32.totalorder %s28, 0
      %s825 = scalar_select %p824, %s28, 0
      %s826 = sadd.s32 %s825, %s823
      %s827 = scalar_lea.vmem %s10, %s826
      %p828 = scmp.lt.s32.totalorder %s27, 1
      %s829 = scalar_select %p828, %s27, 1
      %p830 = scmp.lt.s32.totalorder %s28, 0
      %s831 = scalar_select %p830, %s28, 0
      %s832 = sadd.s32 %s831, %s829
      %s833 = scalar_lea.vmem %s11, %s832
      // Predicated region
      $region57: #{_lambda_.2} parent=55 // pred_check
        %p834 = pneg %p251
      $region58: #{_lambda_.2} parent=55 // pred_check_branch
        %836 = sbr.rel (%p834) target = $region60
      $region59: #{_lambda_.2} parent=55 // pred_region
        %s837 = smul.u32 2, %s28
      $region60: #{_lambda_.2} parent=55 // pred_fallthru
        _
      // Predicated region
      $region61: #{_lambda_.2} parent=55 // pred_check
        %p838 = pneg %p279
      $region62: #{_lambda_.2} parent=55 // pred_check_branch
        %840 = sbr.rel (%p838) target = $region64
      $region63: #{_lambda_.2} parent=55 // pred_region
        _
      $region64: #{_lambda_.2} parent=55 // pred_fallthru
        _
      // Predicated region
      $region65: #{_lambda_.2} parent=55 // pred_check
        %p841 = pneg %p307
      $region66: #{_lambda_.2} parent=55 // pred_check_branch
        %843 = sbr.rel (%p841) target = $region68
      $region67: #{_lambda_.2} parent=55 // pred_region
        _
      $region68: #{_lambda_.2} parent=55 // pred_fallthru
        _
    $region56: #{_lambda_.2} parent=5 // pred_fallthru
      _
    %p844 = scmp.le.s32.totalorder 2, %s18
    // Predicated region
    $region69: #{_lambda_.2} parent=5 // pred_check
      %p845 = pneg %p844
    $region70: #{_lambda_.2} parent=5 // pred_check_branch
      %847 = sbr.rel (%p845) target = $region72
    $region71: #{_lambda_.2} parent=5 // pred_region
      %s848 = ssub.s32 %s18, 2
      // Predicated region
      $region73: #{_lambda_.2} parent=71 // pred_check
        %p849 = pneg %p257
      $region74: #{_lambda_.2} parent=71 // pred_check_branch
        %851 = sbr.rel (%p849) target = $region76
      $region75: #{_lambda_.2} parent=71 // pred_region
        %s852 = smul.u32 2, %s30
        %p853 = scmp.lt.s32.totalorder %s29, 1
        %s854 = scalar_select %p853, %s29, 1
        %p855 = scmp.lt.s32.totalorder %s852, 1
        %s856 = scalar_select %p855, %s852, 1
        %s857 = smul.addr %s854, 2
        %s858 = sadd.s32 %s856, %s857
        %s859 = scalar_lea.vmem %s9, %s858
      $region76: #{_lambda_.2} parent=71 // pred_fallthru
        _
      // Predicated region
      $region77: #{_lambda_.2} parent=71 // pred_check
        %p860 = pneg %p285
      $region78: #{_lambda_.2} parent=71 // pred_check_branch
        %862 = sbr.rel (%p860) target = $region80
      $region79: #{_lambda_.2} parent=71 // pred_region
        %p863 = scmp.lt.s32.totalorder %s29, 1
        %s864 = scalar_select %p863, %s29, 1
        %p865 = scmp.lt.s32.totalorder %s30, 0
        %s866 = scalar_select %p865, %s30, 0
        %s867 = sadd.s32 %s866, %s864
        %s868 = scalar_lea.vmem %s10, %s867
      $region80: #{_lambda_.2} parent=71 // pred_fallthru
        _
      // Predicated region
      $region81: #{_lambda_.2} parent=71 // pred_check
        %p869 = pneg %p313
      $region82: #{_lambda_.2} parent=71 // pred_check_branch
        %871 = sbr.rel (%p869) target = $region84
      $region83: #{_lambda_.2} parent=71 // pred_region
        %p872 = scmp.lt.s32.totalorder %s29, 1
        %s873 = scalar_select %p872, %s29, 1
        %p874 = scmp.lt.s32.totalorder %s30, 0
        %s875 = scalar_select %p874, %s30, 0
        %s876 = sadd.s32 %s875, %s873
        %s877 = scalar_lea.vmem %s11, %s876
      $region84: #{_lambda_.2} parent=71 // pred_fallthru
        _
    $region72: #{_lambda_.2} parent=5 // pred_fallthru
      _
  $region6: #{_lambda_.2} parent=0 // loop_footer
    %s22 = sadd.s32 1, %s18
  $region7: #{_lambda_.2} parent=0 // loop_footer_branch
    %17 = sbr.rel target = $region3
  $region8: #{_lambda_.2} parent=0 // loop_exit
    _

</llo_original>
